<compile_context>
chip_gen: v6e
topology: v6e:2x2x1
jax: 0.10.0
libtpu: 0.0.40
codegen_flags: <defaults>
</compile_context>

<pallas_src>
import functools

import numpy as np
import jax
import jax.numpy as jnp
from jax.experimental import pallas as pl
from jax.experimental.pallas import tpu as pltpu


# ---------------------------------------------------------------------------
# sincos positional-embedding init (port of
# kappamodules.functional.pos_embed.get_sincos_pos_embed_from_seqlens)
# ---------------------------------------------------------------------------
def _sincos_1d_from_grid(grid: np.ndarray, dim: int, max_wavelength: float = 10000.0):
    if dim % 2 == 0:
        padding = None
    else:
        padding = np.zeros((*grid.shape, 1), dtype=np.float32)
        dim -= 1
    omega = 1.0 / max_wavelength ** (np.arange(0, dim, 2, dtype=np.float64) / dim)
    out = grid[..., None] * omega[None, :]          # (..., dim//2)
    emb = np.concatenate([np.sin(out), np.cos(out)], axis=-1).astype(np.float32)
    if padding is not None:
        emb = np.concatenate([emb, padding], axis=-1)
    return emb


def get_sincos_pos_embed_from_seqlens(seqlens, dim, max_wavelength: float = 10000.0):
    grids = [np.arange(s, dtype=np.float64) for s in seqlens]
    grid = np.stack(np.meshgrid(*grids, indexing="ij"))     # (ndim, *seqlens)
    ndim = grid.shape[0]
    if dim % ndim == 0:
        padding = None
    else:
        padding_dim = dim % ndim
        padding = np.zeros((*grid.shape[1:], padding_dim), dtype=np.float32)
        dim -= padding_dim
    pos_embed = np.concatenate(
        [_sincos_1d_from_grid(grid[i], dim // ndim, max_wavelength) for i in range(ndim)],
        axis=-1,
    )
    if padding is not None:
        pos_embed = np.concatenate([pos_embed, padding], axis=-1)
    return pos_embed  # (*seqlens, dim), float32


# ---------------------------------------------------------------------------
# Pallas kernel: broadcast-add a (TR, L) pos tile onto a (1, TR, L) x tile
# ---------------------------------------------------------------------------
def _add_pos_kernel(x_ref, pos_ref, o_ref):
    # x_ref: (1, TR, L), pos_ref: (TR, L) -> broadcast add, stays in x dtype.
    o_ref[...] = x_ref[...] + pos_ref[...]


def _choose_tile_rows(num_rows: int, itemsize: int, lanes: int, target_bytes: int = 1 << 20) -> int:
    """Pick a row-tile: ~target_bytes per buffer, multiple of 8 sublanes.

    target 1 MiB/buffer keeps 2x(x) + 2x(out) + 2x(pos) well under the 16 MiB
    v5e scoped-VMEM default (and trivially under v6e/v7x budgets).
    """
    if num_rows <= 8:
        return int(num_rows)
    tr = min(num_rows, max(8, target_bytes // (lanes * itemsize)))
    if tr < num_rows:
        tr = max(8, (tr // 8) * 8)
    return int(tr)


@functools.partial(jax.jit, static_argnums=(2,))
def _add_pos_pallas(x3, pos2, tile_rows):
    """x3: (B, R, L), pos2: (R, L) -> x3 + pos2[None]."""
    B, R, L = x3.shape
    nr = pl.cdiv(R, tile_rows)
    itemsize = x3.dtype.itemsize
    cost = pl.CostEstimate(
        flops=B * R * L,
        transcendentals=0,
        bytes_accessed=(2 * B * R * L + R * L) * itemsize,
    )
    return pl.pallas_call(
        _add_pos_kernel,
        out_shape=jax.ShapeDtypeStruct((B, R, L), x3.dtype),
        grid_spec=pltpu.PrefetchScalarGridSpec(
            num_scalar_prefetch=0,
            # grid = (row_tiles, batch): batch is the inner loop, so the pos
            # block index (r, 0) is unchanged across consecutive steps and
            # Pallas skips re-DMA of the pos tile per batch element.
            grid=(nr, B),
            in_specs=[
                pl.BlockSpec((1, tile_rows, L), lambda r, b: (b, r, 0)),
                pl.BlockSpec((tile_rows, L), lambda r, b: (r, 0)),
            ],
            out_specs=pl.BlockSpec((1, tile_rows, L), lambda r, b: (b, r, 0)),
        ),
        compiler_params=pltpu.CompilerParams(
            # row-tile axis shards across TensorCores (megacore / v7x);
            # batch axis stays sequential so the resident pos tile is reused.
            dimension_semantics=("parallel", "arbitrary"),
        ),
        cost_estimate=cost,
    )(x3, pos2)


# ---------------------------------------------------------------------------
# Module-equivalent wrapper
# ---------------------------------------------------------------------------
class PositionalEmbedding:
    """Absolute positional embedding (JAX/Pallas port)."""

    def __init__(self, dim: int, grid_size: tuple, learnable: bool = False,
                 init_weights: str = "sincos"):
        self.grid_size = tuple(grid_size)
        self.dim = dim
        self.learnable = learnable  # no optimizer here; forward is identical
        if init_weights == "sincos":
            pe = get_sincos_pos_embed_from_seqlens(self.grid_size, dim)[None]  # (1,*grid,dim)
        elif init_weights == "rand":
            key = jax.random.PRNGKey(42)
            pe = 0.02 * jax.random.truncated_normal(
                key, -2.0, 2.0, (1, *self.grid_size, dim), dtype=jnp.float32)
            pe = np.asarray(pe)
        else:
            raise NotImplementedError
        self.pos_embed = jnp.asarray(pe, dtype=jnp.float32)  # (1, *grid_size, dim)

    def __call__(self, x):
        ndim = x.ndim
        b = x.shape[0]
        c = x.shape[-1]
        S = int(np.prod(self.grid_size))

        x_flat = x.reshape(b, S, c)
        # cast pos to the input dtype (halves pos DMA for bf16 models).
        pos_flat = self.pos_embed.reshape(S, c).astype(x.dtype)

        N = S * c
        if N % 128 == 0:
            # lane-dense layout: every vreg row carries 128 valid lanes,
            # stores lower to full (unmasked) vst.
            R, L = N // 128, 128
            x3 = x_flat.reshape(b, R, L)
            pos2 = pos_flat.reshape(R, L)
        else:
            # fallback: keep channels-last (C) as the lane axis.
            R, L = S, c
            x3 = x_flat
            pos2 = pos_flat

        tile_rows = _choose_tile_rows(R, jnp.dtype(x.dtype).itemsize, L)
        y3 = _add_pos_pallas(x3, pos2, tile_rows)

        y = y3.reshape(b, S, c)
        if ndim < 4:
            return y                                # 'b ... c -> b (...) c'
        return y.reshape(b, *self.grid_size, c)


# ---------------------------------------------------------------------------
if __name__ == "__main__":
    grid_size = (16, 16)
    dim = 32
    B = 2
    S = int(np.prod(grid_size))

    key = jax.random.PRNGKey(0)
    k1, k2 = jax.random.split(key)

    module = PositionalEmbedding(dim=dim, grid_size=grid_size,
                                 learnable=False, init_weights="sincos")

    # ndim >= 4 path: x shaped (B, *grid_size, C)
    x4 = jax.random.normal(k1, (B, *grid_size, dim), dtype=jnp.float32)
    y4 = jax.block_until_ready(module(x4))
    ref4 = x4 + module.pos_embed
    np.testing.assert_allclose(np.asarray(y4), np.asarray(ref4), rtol=1e-6, atol=1e-6)
    assert y4.shape == x4.shape and y4.dtype == x4.dtype

    # ndim < 4 path: x shaped (B, S, C)
    x3 = jax.random.normal(k2, (B, S, dim), dtype=jnp.float32)
    y3 = jax.block_until_ready(module(x3))
    ref3 = x3 + module.pos_embed.reshape(1, S, dim)
    np.testing.assert_allclose(np.asarray(y3), np.asarray(ref3), rtol=1e-6, atol=1e-6)
    assert y3.shape == x3.shape and y3.dtype == x3.dtype

    print("KERNEL_OK")
</pallas_src>

<mosaic_0001>
module attributes {stable_mosaic.version = 11 : i64} {
  func.func @_add_pos_kernel(%arg0: i32, %arg1: i32, %arg2: memref<1x64x128xf32, #tpu.memory_space<vmem>>, %arg3: memref<64x128xf32, #tpu.memory_space<vmem>>, %arg4: memref<1x64x128xf32, #tpu.memory_space<vmem>>) attributes {dimension_semantics = [#tpu.dimension_semantics<parallel>, #tpu.dimension_semantics<arbitrary>], iteration_bounds = array<i64: 1, 2>, scalar_prefetch = 0 : i64, scratch_operands = 0 : i64, tpu.core_type = #tpu.core_type<tc>, window_params = [{transform_indices = @transform_0, window_bounds = array<i64: 1, 64, 128>}, {transform_indices = @transform_1, window_bounds = array<i64: 64, 128>}, {transform_indices = @transform_2, window_bounds = array<i64: 1, 64, 128>}]} {
    %c0 = arith.constant 0 : index
    %c0_0 = arith.constant 0 : index
    %c0_1 = arith.constant 0 : index
    %0 = vector.load %arg2[%c0, %c0_0, %c0_1] : memref<1x64x128xf32, #tpu.memory_space<vmem>>, vector<1x64x128xf32>
    %c0_2 = arith.constant 0 : index
    %c0_3 = arith.constant 0 : index
    %1 = vector.load %arg3[%c0_2, %c0_3] : memref<64x128xf32, #tpu.memory_space<vmem>>, vector<64x128xf32>
    %2 = vector.shape_cast %1 : vector<64x128xf32> to vector<1x64x128xf32>
    %3 = arith.addf %0, %2 : vector<1x64x128xf32>
    %c0_4 = arith.constant 0 : index
    %c0_5 = arith.constant 0 : index
    %c0_6 = arith.constant 0 : index
    %4 = vector.load %arg4[%c0_4, %c0_5, %c0_6] : memref<1x64x128xf32, #tpu.memory_space<vmem>>, vector<1x64x128xf32>
    tpu.vector_store %arg4[%c0_4, %c0_5, %c0_6], %3 {strides = array<i32>} : memref<1x64x128xf32, #tpu.memory_space<vmem>>, vector<1x64x128xf32>,
    return
  }
  func.func @transform_0(%arg0: i32, %arg1: i32) -> (i32, i32, i32) {
    %c0_i32 = arith.constant 0 : i32
    %c0_i32_0 = arith.constant 0 : i32
    return %arg1, %arg0, %c0_i32 : i32, i32, i32
  }
  func.func @transform_1(%arg0: i32, %arg1: i32) -> (i32, i32) {
    %c0_i32 = arith.constant 0 : i32
    %c0_i32_0 = arith.constant 0 : i32
    return %arg0, %c0_i32 : i32, i32
  }
  func.func @transform_2(%arg0: i32, %arg1: i32) -> (i32, i32, i32) {
    %c0_i32 = arith.constant 0 : i32
    %c0_i32_0 = arith.constant 0 : i32
    return %arg1, %arg0, %c0_i32 : i32, i32, i32
  }
}

</mosaic_0001>

<llo_original>
// kernel: _add_pos_pallas.1
$region0: #{_add_pos_pallas.1}
  #allocation0 [shape = 'u32[]', space=smem, size = 0x4, offset = 0x4, fixed_abs, tag = 'smem constant byte address 0x4 - core index']
  #allocation1 [shape = 'u32[144,128]{1,0:T(1,128)}', space=vmem, size = 0x12000, scoped, tag = 'internal scratch']
  %s0 = inlined_call_operand.hbm [shape: f32[2,64,128], index: 0, kind: input, shape index: {}]
  %s1 = inlined_call_operand.hbm [shape: f32[64,128], index: 1, kind: input, shape index: {}]
  %s2 = inlined_call_operand.hbm [shape: f32[2,64,128], index: 2, kind: output, shape index: {}]
  %s3 = sld [smem:[#allocation0]]
  $region49: #{_add_pos_pallas.1} parent=0
    _
  %s5 = ssub.s32 1, %s3
  %s6 = scalar_select 0, %s5, %s3
  $region1: #{_add_pos_pallas.1} parent=0
    #allocation2 [shape = 'u8[65536]{0}', space=vmem, size = 0x10000, scoped, tag = 'input window, operand 0']
    #allocation3 [shape = 's32[2]{0}', space=sflag, size = 0x8, scoped, tag = 'scoped memory for _add_pos_pallas.1']
    #allocation4 [shape = 's32[2]{0}', space=sflag, size = 0x8, scoped, tag = 'scoped memory for _add_pos_pallas.1']
    #allocation5 [shape = 'u8[32768]{0}', space=vmem, size = 0x8000, scoped, tag = 'input window, operand 1, single buffered']
    #allocation6 [shape = 's32[1]{0}', space=sflag, size = 0x4, scoped, tag = 'scoped memory for _add_pos_pallas.1']
    #allocation7 [shape = 'u8[65536]{0}', space=vmem, size = 0x10000, scoped, tag = 'output window, operand 0']
    %7 = vsyncpa [#allocation3], 0
    %s8 = scalar_lea.sflag [#allocation3], 1
    %9 = vsyncpa %s8, 0
    %10 = vsyncpa [#allocation6], 0
    %11 = vsyncpa [#allocation4], 0
    %s12 = scalar_lea.sflag [#allocation4], 1
    %13 = vsyncpa %s12, 0
    loop: start=0, step=1, limit=4
    $region2: #{_add_pos_pallas.1} parent=1 // loop_pre_header
      _
    $region3: #{_add_pos_pallas.1} parent=1 // loop_header
      %s15 = sphi 0, %s19
      %p16 = scmp.ge.s32.totalorder %s15, 4
      %s22 = sphi 0, %s34
      %s23 = sphi 0, %s30
      %s24 = sphi 0, %s22
      %s25 = sphi 0, %s23
      %s26 = sphi 0, %s24
      %s27 = sphi 0, %s25
      %s39 = sphi 0, %s41
      %s42 = sphi 0, %s39
      %s43 = sphi 0, %s42
      %s59 = sphi 0, %s43
      %s65 = sphi 0, %s67
      %s68 = sphi 0, %s65
      %s69 = sphi 0, %s68
      %s85 = sphi 0, %s69
      %s93 = sphi 0, %s95
      %s96 = sphi 0, %s93
      %s97 = sphi 0, %s96
      %s113 = sphi 0, %s97
    $region4: #{_add_pos_pallas.1} parent=1 // loop_header_branch
      %18 = sbr.rel (%p16) target = $region8
    $region5: #{_add_pos_pallas.1} parent=1 // loop_body
      %s20 = ssub.s32 %s15, 1
      %s21 = ssub.s32 %s15, 2
      %s28 = sadd.s32 1, %s23
      %p29 = scmp.ge.s32.totalorder %s28, 2
      %s30 = scalar_select %p29, 0, %s28
      %s31 = sadd.s32 1, %s22
      %s32 = scalar_select %p29, %s31, %s22
      %p33 = scmp.ge.s32.totalorder %s32, 1
      %s34 = scalar_select %p33, 0, %s32
      %s35 = ssub.s32 %s23, %s30
      %s36 = ssub.s32 %s22, %s34
      %s37 = sor.u32 %s35, %s36
      %p38 = scmp.eq.s32.totalorder %s37, 0
      %s40 = sadd.s32 %s39, 1
      %s41 = scalar_select %p38, %s39, %s40
      %p44 = pneg %p38
      %p45 = scmp.eq.s32.totalorder %s15, 1
      %p46 = por %p44, %p45
      %p47 = scmp.ne.s32.totalorder %s39, %s42
      %p48 = scmp.eq.s32.totalorder %s15, 0
      %p49 = por %p47, %p48
      %p50 = scmp.ne.s32.totalorder %s39, %s42
      %p51 = scmp.eq.s32.totalorder %s20, 1
      %p52 = por %p50, %p51
      %p53 = scmp.ne.s32.totalorder %s42, %s43
      %p54 = scmp.eq.s32.totalorder %s20, 0
      %p55 = por %p53, %p54
      %p56 = scmp.ne.s32.totalorder %s42, %s43
      %p57 = scmp.eq.s32.totalorder %s21, 1
      %p58 = por %p56, %p57
      %p60 = scmp.ne.s32.totalorder %s43, %s59
      %p61 = scmp.eq.s32.totalorder %s21, 0
      %p62 = por %p60, %p61
      %s63 = ssub.s32 %s22, %s34
      %p64 = scmp.eq.s32.totalorder %s63, 0
      %s66 = sadd.s32 %s65, 1
      %s67 = scalar_select %p64, %s65, %s66
      %p70 = pneg %p64
      %p71 = scmp.eq.s32.totalorder %s15, 1
      %p72 = por %p70, %p71
      %p73 = scmp.ne.s32.totalorder %s65, %s68
      %p74 = scmp.eq.s32.totalorder %s15, 0
      %p75 = por %p73, %p74
      %p76 = scmp.ne.s32.totalorder %s65, %s68
      %p77 = scmp.eq.s32.totalorder %s20, 1
      %p78 = por %p76, %p77
      %p79 = scmp.ne.s32.totalorder %s68, %s69
      %p80 = scmp.eq.s32.totalorder %s20, 0
      %p81 = por %p79, %p80
      %p82 = scmp.ne.s32.totalorder %s68, %s69
      %p83 = scmp.eq.s32.totalorder %s21, 1
      %p84 = por %p82, %p83
      %p86 = scmp.ne.s32.totalorder %s69, %s85
      %p87 = scmp.eq.s32.totalorder %s21, 0
      %p88 = por %p86, %p87
      %s89 = ssub.s32 %s23, %s30
      %s90 = ssub.s32 %s22, %s34
      %s91 = sor.u32 %s89, %s90
      %p92 = scmp.eq.s32.totalorder %s91, 0
      %s94 = sadd.s32 %s93, 1
      %s95 = scalar_select %p92, %s93, %s94
      %p98 = pneg %p92
      %p99 = scmp.eq.s32.totalorder %s15, 1
      %p100 = por %p98, %p99
      %p101 = scmp.ne.s32.totalorder %s93, %s96
      %p102 = scmp.eq.s32.totalorder %s15, 0
      %p103 = por %p101, %p102
      %p104 = scmp.ne.s32.totalorder %s93, %s96
      %p105 = scmp.eq.s32.totalorder %s20, 1
      %p106 = por %p104, %p105
      %p107 = scmp.ne.s32.totalorder %s96, %s97
      %p108 = scmp.eq.s32.totalorder %s20, 0
      %p109 = por %p107, %p108
      %p110 = scmp.ne.s32.totalorder %s96, %s97
      %p111 = scmp.eq.s32.totalorder %s21, 1
      %p112 = por %p110, %p111
      %p114 = scmp.ne.s32.totalorder %s97, %s113
      %p115 = scmp.eq.s32.totalorder %s21, 0
      %p116 = por %p114, %p115
      %p117 = scmp.le.s32.totalorder 1, %s15
      %p118 = scmp.lt.s32.totalorder %s15, 3
      %p119 = pnand %p117, %p118
      %p120 = pneg %p119
      // Predicated region
      $region9: #{_add_pos_pallas.1} parent=5 // pred_check
        _
      $region10: #{_add_pos_pallas.1} parent=5 // pred_check_branch
        %122 = sbr.rel (%p119) target = $region12
      $region11: #{_add_pos_pallas.1} parent=5 // pred_region
        %s123 = ssub.s32 %s15, 1
        // Predicated region
        $region13: #{_add_pos_pallas.1} parent=11 // pred_check
          %p124 = pneg %p81
        $region14: #{_add_pos_pallas.1} parent=11 // pred_check_branch
          %126 = sbr.rel (%p124) target = $region16
        $region15: #{_add_pos_pallas.1} parent=11 // pred_region
          %s127 = smul.u32 8, %s24
          %s129 = ssub.s32 1024, 1024
          %130 = vsyncadd [#allocation6], %s129
          %s131 = smul.addr %s127, 128
          %s132 = scalar_lea.hbm %s1, %s131
          %s133 = sshll.u32 [#allocation5], 4
          %s134 = int_to_ptr.vmem [resolvable:$true] %s133
          %139 = dma.hbm_to_vmem [thread:$0]  %s132, 1024, %s134, [#allocation6], 128, 128, 8
        $region16: #{_add_pos_pallas.1} parent=11 // pred_fallthru
          _
      $region12: #{_add_pos_pallas.1} parent=5 // pred_fallthru
        _
      %p140 = scmp.lt.s32.totalorder %s15, 2
      // Predicated region
      $region17: #{_add_pos_pallas.1} parent=5 // pred_check
        %p141 = pneg %p140
      $region18: #{_add_pos_pallas.1} parent=5 // pred_check_branch
        %143 = sbr.rel (%p141) target = $region20
      $region19: #{_add_pos_pallas.1} parent=5 // pred_region
        // Predicated region
        $region21: #{_add_pos_pallas.1} parent=19 // pred_check
          %p144 = pneg %p49
        $region22: #{_add_pos_pallas.1} parent=19 // pred_check_branch
          %146 = sbr.rel (%p144) target = $region24
        $region23: #{_add_pos_pallas.1} parent=19 // pred_region
          %s147 = sand.u32 %s39, 1
          %s148 = scalar_lea.sflag [#allocation3], %s147
          %s149 = sand.u32 %s39, 1
          %s150 = smul.addr %s149, 64
          %s151 = scalar_lea.vmem [#allocation2], %s150
          %s152 = smul.u32 8, %s22
          %s154 = ssub.s32 1024, 1024
          %155 = vsyncadd %s148, %s154
          %s156 = smul.addr %s23, 8
          %s157 = sadd.s32 %s152, %s156
          %s158 = smul.addr %s157, 128
          %s159 = scalar_lea.hbm %s0, %s158
          %s160 = sshll.u32 %s151, 4
          %s161 = int_to_ptr.vmem [resolvable:$true] %s160
          %166 = dma.hbm_to_vmem [thread:$0]  %s159, 1024, %s161, %s148, 128, 128, 8
        $region24: #{_add_pos_pallas.1} parent=19 // pred_fallthru
          _
      $region20: #{_add_pos_pallas.1} parent=5 // pred_fallthru
        _
      %p167 = scmp.le.s32.totalorder 1, %s15
      %p168 = scmp.lt.s32.totalorder %s15, 3
      %p169 = pnand %p167, %p168
      %p170 = pneg %p169
      // Predicated region
      $region25: #{_add_pos_pallas.1} parent=5 // pred_check
        _
      $region26: #{_add_pos_pallas.1} parent=5 // pred_check_branch
        %172 = sbr.rel (%p169) target = $region28
      $region27: #{_add_pos_pallas.1} parent=5 // pred_region
        %s173 = ssub.s32 %s15, 1
        %s174 = sand.u32 %s42, 1
        %s175 = scalar_lea.sflag [#allocation3], %s174
        %s176 = sand.u32 %s42, 1
        %s177 = smul.addr %s176, 64
        %s178 = scalar_lea.vmem [#allocation2], %s177
        // Predicated region
        $region29: #{_add_pos_pallas.1} parent=27 // pred_check
          %p179 = pneg %p55
        $region30: #{_add_pos_pallas.1} parent=27 // pred_check_branch
          %181 = sbr.rel (%p179) target = $region32
        $region31: #{_add_pos_pallas.1} parent=27 // pred_region
          %182 = dma.done %s175, 1024
        $region32: #{_add_pos_pallas.1} parent=27 // pred_fallthru
          _
        // Predicated region
        $region33: #{_add_pos_pallas.1} parent=27 // pred_check
          %p183 = pneg %p81
        $region34: #{_add_pos_pallas.1} parent=27 // pred_check_branch
          %185 = sbr.rel (%p183) target = $region36
        $region35: #{_add_pos_pallas.1} parent=27 // pred_region
          %186 = dma.done [#allocation6], 1024
        $region36: #{_add_pos_pallas.1} parent=27 // pred_fallthru
          _
        %s187 = sand.u32 %s42, 1
        %s188 = scalar_lea.sflag [#allocation3], %s187
        %s189 = sand.u32 %s42, 1
        %s190 = smul.addr %s189, 64
        %s191 = scalar_lea.vmem [#allocation2], %s190
        %p192 = pneg %p55
        %p193 = pneg %p52
        %p194 = pneg %p81
        %p195 = pneg %p78
        %p196 = pneg %p109
        %p197 = pneg %p106
        %s198 = sand.u32 %s96, 1
        %s199 = scalar_lea.sflag [#allocation4], %s198
        %s200 = sand.u32 %s96, 1
        %s201 = smul.addr %s200, 64
        %s202 = scalar_lea.vmem [#allocation7], %s201
        %s203 = smul.u32 8, %s24
        %s204 = smul.u32 8, %s24
        %s205 = smul.u32 8, %s24
        %v206 = vld [vmem:[%s178] sm:$0xff]
        %v207 = vld [vmem:[%s178 + $0x8] sm:$0xff]
        %v208 = vld [vmem:[%s178 + $0x10] sm:$0xff]
        %v209 = vld [vmem:[%s178 + $0x18] sm:$0xff]
        %v210 = vld [vmem:[%s178 + $0x20] sm:$0xff]
        %v211 = vld [vmem:[%s178 + $0x28] sm:$0xff]
        %v212 = vld [vmem:[%s178 + $0x30] sm:$0xff]
        %v213 = vld [vmem:[%s178 + $0x38] sm:$0xff]
        %v214 = vld [vmem:[#allocation5] sm:$0xff]
        %v215 = vld [vmem:[#allocation5 + $0x8] sm:$0xff]
        %v216 = vld [vmem:[#allocation5 + $0x10] sm:$0xff]
        %v217 = vld [vmem:[#allocation5 + $0x18] sm:$0xff]
        %v218 = vld [vmem:[#allocation5 + $0x20] sm:$0xff]
        %v219 = vld [vmem:[#allocation5 + $0x28] sm:$0xff]
        %v220 = vld [vmem:[#allocation5 + $0x30] sm:$0xff]
        %v221 = vld [vmem:[#allocation5 + $0x38] sm:$0xff]
        %v222 = vadd.f32 %v206, %v214
        %v223 = vadd.f32 %v207, %v215
        %v224 = vadd.f32 %v208, %v216
        %v225 = vadd.f32 %v209, %v217
        %v226 = vadd.f32 %v210, %v218
        %v227 = vadd.f32 %v211, %v219
        %v228 = vadd.f32 %v212, %v220
        %v229 = vadd.f32 %v213, %v221
        %230 = vst [vmem:[%s202] sm:$0xff] %v222
        %231 = vst [vmem:[%s202 + $0x8] sm:$0xff] %v223
        %232 = vst [vmem:[%s202 + $0x10] sm:$0xff] %v224
        %233 = vst [vmem:[%s202 + $0x18] sm:$0xff] %v225
        %234 = vst [vmem:[%s202 + $0x20] sm:$0xff] %v226
        %235 = vst [vmem:[%s202 + $0x28] sm:$0xff] %v227
        %236 = vst [vmem:[%s202 + $0x30] sm:$0xff] %v228
        %237 = vst [vmem:[%s202 + $0x38] sm:$0xff] %v229
        %s238 = sand.u32 %s96, 1
        %s239 = scalar_lea.sflag [#allocation4], %s238
        %s240 = sand.u32 %s96, 1
        %s241 = smul.addr %s240, 64
        %s242 = scalar_lea.vmem [#allocation7], %s241
        // Predicated region
        $region37: #{_add_pos_pallas.1} parent=27 // pred_check
          %p243 = pneg %p106
        $region38: #{_add_pos_pallas.1} parent=27 // pred_check_branch
          %245 = sbr.rel (%p243) target = $region40
        $region39: #{_add_pos_pallas.1} parent=27 // pred_region
          %s246 = smul.u32 8, %s24
          %s248 = ssub.s32 1024, 1024
          %249 = vsyncadd %s239, %s248
          %s250 = smul.addr %s25, 8
          %s251 = sadd.s32 %s246, %s250
          %s252 = smul.addr %s251, 128
          %s253 = scalar_lea.hbm %s2, %s252
          %s254 = sshll.u32 %s242, 4
          %s255 = int_to_ptr.vmem [resolvable:$true] %s254
          %260 = dma.vmem_to_hbm [thread:$0]  %s255, 1024, %s253, %s239, 128, 128, 8
        $region40: #{_add_pos_pallas.1} parent=27 // pred_fallthru
          _
      $region28: #{_add_pos_pallas.1} parent=5 // pred_fallthru
        _
      %p261 = scmp.le.s32.totalorder 2, %s15
      // Predicated region
      $region41: #{_add_pos_pallas.1} parent=5 // pred_check
        %p262 = pneg %p261
      $region42: #{_add_pos_pallas.1} parent=5 // pred_check_branch
        %264 = sbr.rel (%p262) target = $region44
      $region43: #{_add_pos_pallas.1} parent=5 // pred_region
        %s265 = ssub.s32 %s15, 2
        // Predicated region
        $region45: #{_add_pos_pallas.1} parent=43 // pred_check
          %p266 = pneg %p112
        $region46: #{_add_pos_pallas.1} parent=43 // pred_check_branch
          %268 = sbr.rel (%p266) target = $region48
        $region47: #{_add_pos_pallas.1} parent=43 // pred_region
          %s269 = sand.u32 %s97, 1
          %s270 = scalar_lea.sflag [#allocation4], %s269
          %s271 = sand.u32 %s97, 1
          %s272 = smul.addr %s271, 64
          %s273 = scalar_lea.vmem [#allocation7], %s272
          %274 = dma.done %s270, 1024
        $region48: #{_add_pos_pallas.1} parent=43 // pred_fallthru
          _
      $region44: #{_add_pos_pallas.1} parent=5 // pred_fallthru
        _
    $region6: #{_add_pos_pallas.1} parent=1 // loop_footer
      %s19 = sadd.s32 1, %s15
    $region7: #{_add_pos_pallas.1} parent=1 // loop_footer_branch
      %14 = sbr.rel target = $region3
    $region8: #{_add_pos_pallas.1} parent=1 // loop_exit
      _
    %275 = vsyncpa [#allocation3], 1
    %s276 = scalar_lea.sflag [#allocation3], 1
    %277 = vsyncpa %s276, 1
    %278 = vsyncpa [#allocation6], 1
    %279 = vsyncpa [#allocation4], 1
    %s280 = scalar_lea.sflag [#allocation4], 1
    %281 = vsyncpa %s280, 1

</llo_original>
